<compile_context>
chip_gen: v6e
topology: v6e:2x2x1
jax: 0.10.0
libtpu: 0.0.40
codegen_flags: <defaults>
</compile_context>

<pallas_src>
import math
import functools

import jax
import jax.numpy as jnp
from jax import lax
from jax.experimental import pallas as pl
from jax.experimental.pallas import tpu as pltpu


# ----------------------------------------------------------------------------
# Pallas kernel: layer-2 of the per-edge MLP + masked max aggregation
# (lane-dense: centers on the minor/lane axis everywhere)
# ----------------------------------------------------------------------------
def _pointconv_kernel(pre1_ref, cnt_ref, w2t_ref, b2_ref, out_ref, *, k_unroll):
    # pre1_ref: (K, H, tile_m) bf16   relu'd layer-1 activations, neighbor-major
    # cnt_ref : (1, tile_m)    int32  number of valid neighbors per center
    # w2t_ref : (C, H)         bf16   transposed layer-2 weight
    # b2_ref  : (C, 1)         f32    layer-2 bias (added once, in the epilogue)
    # out_ref : (C, tile_m)    f32
    k_total, _, tm = pre1_ref.shape
    c = w2t_ref.shape[0]

    cnt = cnt_ref[...]                        # (1, tm) int32
    w2t = w2t_ref[...]                        # (C, H)  bf16

    neg = jnp.float32(-1e30)

    def chunk_body(i, acc):
        base = pl.multiple_of(i * k_unroll, k_unroll)
        for jj in range(k_unroll):
            pre_j = pre1_ref[base + jj]                                    # (H, tm) bf16
            # raw layer-2 message (no bias): MXU matmul, lane-dense output
            msg = jnp.dot(w2t, pre_j, preferred_element_type=jnp.float32)  # (C, tm) f32
            valid = (base + jj) < cnt                                      # (1, tm) bool
            acc = jnp.maximum(acc, jnp.where(valid, msg, neg))
        return acc

    acc = lax.fori_loop(0, k_total // k_unroll, chunk_body,
                        jnp.full((c, tm), neg, jnp.float32))

    # Shared bias + final ReLU once per tile: max_j relu(m_j + b) == relu(b + max_j m_j).
    # A center with zero valid neighbors (padding) stays at `neg` and clamps to 0.
    out_ref[...] = jnp.maximum(acc + b2_ref[...], 0.0)


def _choose_k_unroll(k):
    for c in (4, 2, 1):
        if k % c == 0:
            return c
    return 1


def _choose_tile_m(m, target=256):
    """256-wide center tiles at scale (>=2 grid steps for M>=512, >=4 for M>=1024
    so v7x's two TensorCores both get work); small problems use one lane-dense
    tile padded up to a multiple of 128."""
    if m <= target:
        return max(128, ((m + 127) // 128) * 128)
    return target


def pointconv_pallas(pre1_t, counts, w2t, b2, *, tile_m):
    """pre1_t: (K, H, Mp) bf16 relu'd layer-1 activations (neighbor-major, centers on lanes);
       counts: (1, Mp) int32; w2t: (C, H) bf16; b2: (C, 1) f32  ->  (C, Mp) f32."""
    K, H, Mp = pre1_t.shape
    C = w2t.shape[0]
    assert Mp % tile_m == 0
    k_unroll = _choose_k_unroll(K)
    kernel = functools.partial(_pointconv_kernel, k_unroll=k_unroll)
    return pl.pallas_call(
        kernel,
        out_shape=jax.ShapeDtypeStruct((C, Mp), jnp.float32),
        grid_spec=pltpu.PrefetchScalarGridSpec(
            num_scalar_prefetch=0,
            grid=(Mp // tile_m,),
            in_specs=[
                pl.BlockSpec((K, H, tile_m), lambda i: (0, 0, i)),   # pre1 (bf16 stream)
                pl.BlockSpec((1, tile_m), lambda i: (0, i)),         # neighbor counts
                pl.BlockSpec((C, H), lambda i: (0, 0)),              # W2^T (resident)
                pl.BlockSpec((C, 1), lambda i: (0, 0)),              # b2 (resident)
            ],
            out_specs=pl.BlockSpec((C, tile_m), lambda i: (0, i)),
        ),
        compiler_params=pltpu.CompilerParams(
            dimension_semantics=("parallel",)),
    )(pre1_t, counts, w2t, b2)


# ----------------------------------------------------------------------------
# Glue: farthest-point sampling (per batch) and radius (ball) neighbor query
# ----------------------------------------------------------------------------
def _fps_single(p, n_samples):
    """Farthest point sampling on one batch segment; start at index 0."""
    n = p.shape[0]

    def body(i, state):
        sel, dmin = state
        last = p[sel[i - 1]]
        d = jnp.sum((p - last) ** 2, axis=-1)
        dmin = jnp.minimum(dmin, d)
        sel = sel.at[i].set(jnp.argmax(dmin).astype(jnp.int32))
        return sel, dmin

    sel0 = jnp.zeros((n_samples,), jnp.int32)
    dmin0 = jnp.full((n,), jnp.inf, jnp.float32)
    sel, _ = lax.fori_loop(1, n_samples, body, (sel0, dmin0))
    return sel


def _radius(pos, pos_c, batch, batch_c, r, k):
    """Up to k in-radius same-batch neighbors per center (lowest index first, so
    valid neighbors are packed at the front), plus the per-center valid count."""
    n = pos.shape[0]
    d2 = jnp.sum((pos_c[:, None, :] - pos[None, :, :]) ** 2, axis=-1)   # (M, N)
    valid = (d2 <= r * r) & (batch_c[:, None] == batch[None, :])
    key = jnp.where(valid, jnp.arange(n, dtype=jnp.int32)[None, :], n)
    neigh_idx = jnp.argsort(key, axis=1)[:, :k].astype(jnp.int32)       # (M, K)
    counts = jnp.minimum(jnp.sum(valid, axis=1), k).astype(jnp.int32)   # (M,)
    return neigh_idx, counts


def _edge_features(x, pos, batch, w1, b1, *, ratio, r, k, num_batches, points_per_batch):
    """FPS + radius query + layer-1 of the edge MLP (ReLU hoisted, bf16 cast).
    Returns pre1 (K, M, H) bf16, counts (M,) int32, pos_c, batch_c."""
    f_dim = x.shape[1]
    n_per = points_per_batch
    n_samp = int(math.ceil(ratio * n_per))

    # fps per contiguous batch segment -> flat indices into pos
    pos_b = pos.reshape(num_batches, n_per, 3)
    local_idx = jax.vmap(lambda p: _fps_single(p, n_samp))(pos_b)
    idx = (local_idx + (jnp.arange(num_batches, dtype=jnp.int32)[:, None] * n_per)).reshape(-1)
    pos_c = pos[idx]
    batch_c = batch[idx]

    # radius neighbor search (max k neighbors) + per-center valid counts
    neigh_idx, counts = _radius(pos, pos_c, batch, batch_c, r, k)

    # hoisted layer-1 x-projection: per-POINT matmul (N x F -> N x H)
    hx = x @ w1[:f_dim, :]                                    # (N, H) f32

    # neighbor-major edge gather fused with the 3-wide rel projection, bias and
    # the layer-1 ReLU (hoisted out of the kernel), then quantized to bf16.
    nt = neigh_idx.T                                          # (K, M)
    rel = pos[nt] - pos_c[None, :, :]                         # (K, M, 3) = pos_j - pos_i
    pre1 = jnp.maximum(hx[nt] + rel @ w1[f_dim:, :] + b1, 0.0).astype(jnp.bfloat16)
    return pre1, counts, pos_c, batch_c


# ----------------------------------------------------------------------------
# SAModule.forward equivalent
# ----------------------------------------------------------------------------
@functools.partial(jax.jit, static_argnames=("ratio", "r", "k", "num_batches", "points_per_batch"))
def sa_module_forward(params, x, pos, batch, *, ratio, r, k, num_batches, points_per_batch):
    w1, b1, w2, b2 = params

    pre1, counts, pos_c, batch_c = _edge_features(
        x, pos, batch, w1, b1, ratio=ratio, r=r, k=k,
        num_batches=num_batches, points_per_batch=points_per_batch)
    m = pre1.shape[1]

    # lane-dense relayout: centers on the minor axis -> (K, H, M)
    pre1_t = jnp.transpose(pre1, (0, 2, 1))

    # pad centers to a multiple of tile_m (padded centers: count 0 -> output 0 -> sliced off)
    tile_m = _choose_tile_m(m)
    mp = ((m + tile_m - 1) // tile_m) * tile_m
    pad = mp - m
    if pad:
        pre1_t = jnp.pad(pre1_t, ((0, 0), (0, 0), (0, pad)))
        counts = jnp.pad(counts, (0, pad))
    counts = counts.reshape(1, mp).astype(jnp.int32)

    # PointNetConv layer-2 MLP + masked max aggregation (Pallas kernel), transposed output
    out_t = pointconv_pallas(
        pre1_t, counts,
        w2.T.astype(jnp.bfloat16),
        b2.reshape(-1, 1).astype(jnp.float32),
        tile_m=tile_m)                                        # (C, Mp) f32
    x_out = out_t[:, :m].T                                    # (M, C)
    return x_out, pos_c, batch_c


def _ref_pointconv(pre1_bf16, counts, w2_bf16, b2):
    """Pure-JAX reference for the kernel hot path (same bf16 quantization, f32 math).
    pre1_bf16: (K, M, H) already relu'd."""
    h = pre1_bf16.astype(jnp.float32)                                   # (K, M, H)
    msg = jnp.maximum(h @ w2_bf16.astype(jnp.float32) + b2, 0.0)        # (K, M, C)
    kk = pre1_bf16.shape[0]
    mask = jnp.arange(kk)[:, None] < counts[None, :]                    # (K, M)
    msg = jnp.where(mask[:, :, None], msg, 0.0)
    return jnp.max(msg, axis=0)                                         # (M, C)


if __name__ == "__main__":
    # Small shapes: B=2 batches x 32 points, F=5 point features, pos dim 3.
    # ratio=0.5 -> 16 centers/batch (M=32); r=0.5; max 64 neighbors.
    B, N_PER, F = 2, 32, 5
    N = B * N_PER
    RATIO, R, K = 0.5, 0.5, 64
    D_IN, HID, C_OUT = F + 3, 32, 32

    key = jax.random.PRNGKey(0)
    kx, kp, kw1, kb1, kw2, kb2 = jax.random.split(key, 6)

    x = jax.random.normal(kx, (N, F), jnp.float32)
    pos = jax.random.uniform(kp, (N, 3), jnp.float32)
    batch = jnp.repeat(jnp.arange(B, dtype=jnp.int32), N_PER)

    # nn = Seq(Lin(F+3, 32), ReLU, Lin(32, 32), ReLU) -- PyTorch default-style init.
    lim1 = 1.0 / math.sqrt(D_IN)
    lim2 = 1.0 / math.sqrt(HID)
    w1 = jax.random.uniform(kw1, (D_IN, HID), jnp.float32, -lim1, lim1)
    b1 = jax.random.uniform(kb1, (HID,), jnp.float32, -lim1, lim1)
    w2 = jax.random.uniform(kw2, (HID, C_OUT), jnp.float32, -lim2, lim2)
    b2 = jax.random.uniform(kb2, (C_OUT,), jnp.float32, -lim2, lim2)
    params = (w1, b1, w2, b2)

    x_out, pos_out, batch_out = sa_module_forward(
        params, x, pos, batch,
        ratio=RATIO, r=R, k=K, num_batches=B, points_per_batch=N_PER)
    jax.block_until_ready((x_out, pos_out, batch_out))

    # Sanity check the Pallas hot path against a pure-JAX reference that follows
    # the same quantization (bf16 inputs / weights, f32 accumulation).
    pre1_ref, counts_ref, pos_c, batch_c = _edge_features(
        x, pos, batch, w1, b1, ratio=RATIO, r=R, k=K,
        num_batches=B, points_per_batch=N_PER)
    ref = _ref_pointconv(pre1_ref, counts_ref, w2.astype(jnp.bfloat16), b2)

    n_samp = int(math.ceil(RATIO * N_PER))
    M = B * n_samp
    assert x_out.shape == (M, C_OUT)
    assert pos_out.shape == (M, 3) and batch_out.shape == (M,)
    assert jnp.allclose(pos_out, pos_c) and jnp.array_equal(batch_out, batch_c)
    assert jnp.allclose(x_out, ref, atol=2e-3, rtol=2e-3)

    print("KERNEL_OK")
</pallas_src>

<mosaic_0001>
module attributes {stable_mosaic.version = 11 : i64} {
  func.func @_pointconv_kernel(%arg0: i32, %arg1: memref<64x32x128xbf16, #tpu.memory_space<vmem>>, %arg2: memref<1x128xi32, #tpu.memory_space<vmem>>, %arg3: memref<32x32xbf16, #tpu.memory_space<vmem>>, %arg4: memref<32x1xf32, #tpu.memory_space<vmem>>, %arg5: memref<32x128xf32, #tpu.memory_space<vmem>>) attributes {dimension_semantics = [#tpu.dimension_semantics<parallel>], iteration_bounds = array<i64: 1>, scalar_prefetch = 0 : i64, scratch_operands = 0 : i64, tpu.core_type = #tpu.core_type<tc>, window_params = [{transform_indices = @transform_0, window_bounds = array<i64: 64, 32, 128>}, {transform_indices = @transform_1, window_bounds = array<i64: 1, 128>}, {pipeline_mode = #tpu.pipeline_mode<synchronous>, transform_indices = @transform_2, window_bounds = array<i64: 32, 32>}, {pipeline_mode = #tpu.pipeline_mode<synchronous>, transform_indices = @transform_3, window_bounds = array<i64: 32, 1>}, {transform_indices = @transform_4, window_bounds = array<i64: 32, 128>}]} {
    %c0 = arith.constant 0 : index
    %c0_0 = arith.constant 0 : index
    %0 = vector.load %arg2[%c0, %c0_0] : memref<1x128xi32, #tpu.memory_space<vmem>>, vector<1x128xi32>
    %c0_1 = arith.constant 0 : index
    %c0_2 = arith.constant 0 : index
    %1 = vector.load %arg3[%c0_1, %c0_2] : memref<32x32xbf16, #tpu.memory_space<vmem>>, vector<32x32xbf16>
    %cst = arith.constant -1.000000e+30 : f32
    %2 = vector.broadcast %cst : f32 to vector<32x128xf32>
    %cst_3 = arith.constant -1.000000e+30 : f32
    %c0_i32 = arith.constant 0 : i32
    %c16_i32 = arith.constant 16 : i32
    %3 = arith.addi %c0_i32, %c16_i32 : i32
    %c1_i32 = arith.constant 1 : i32
    %4 = scf.for %arg6 = %c0_i32 to %3 step %c1_i32 iter_args(%arg7 = %2) -> (vector<32x128xf32>)  : i32 {
      %c4_i32 = arith.constant 4 : i32
      %11 = arith.muli %arg6, %c4_i32 : i32
      %12 = tpu.assume_multiple %11, 4 : i32
      %c0_i32_10 = arith.constant 0 : i32
      %13 = arith.addi %12, %c0_i32_10 : i32
      %14 = arith.index_cast %13 : i32 to index
      %c0_11 = arith.constant 0 : index
      %c0_12 = arith.constant 0 : index
      %15 = vector.load %arg1[%14, %c0_11, %c0_12] : memref<64x32x128xbf16, #tpu.memory_space<vmem>>, vector<1x32x128xbf16>
      %16 = vector.shape_cast %15 : vector<1x32x128xbf16> to vector<32x128xbf16>
      %cst_13 = arith.constant dense<0.000000e+00> : vector<32x128xf32>
      %17 = tpu.matmul %1, %16, %cst_13 {dimension_numbers = #tpu.dot_dimension_numbers<[1], [0], [0], [1], [0, 0, 1, 1], [], []>} : vector<32x32xbf16>, vector<32x128xbf16>, vector<32x128xf32> -> vector<32x128xf32>
      %c0_i32_14 = arith.constant 0 : i32
      %18 = arith.addi %12, %c0_i32_14 : i32
      %19 = vector.broadcast %18 : i32 to vector<1x128xi32>
      %20 = arith.cmpi slt, %19, %0 : vector<1x128xi32>
      %21 = vector.shape_cast %20 : vector<1x128xi1> to vector<1x128xi1>
      %22 = vector.broadcast %21 : vector<1x128xi1> to vector<32x128xi1>
      %23 = vector.broadcast %cst_3 : f32 to vector<32x128xf32>
      %24 = arith.select %22, %17, %23 : vector<32x128xi1>, vector<32x128xf32>
      %25 = arith.maximumf %arg7, %24 : vector<32x128xf32>
      %c1_i32_15 = arith.constant 1 : i32
      %26 = arith.addi %12, %c1_i32_15 : i32
      %27 = arith.index_cast %26 : i32 to index
      %c0_16 = arith.constant 0 : index
      %c0_17 = arith.constant 0 : index
      %28 = vector.load %arg1[%27, %c0_16, %c0_17] : memref<64x32x128xbf16, #tpu.memory_space<vmem>>, vector<1x32x128xbf16>
      %29 = vector.shape_cast %28 : vector<1x32x128xbf16> to vector<32x128xbf16>
      %cst_18 = arith.constant dense<0.000000e+00> : vector<32x128xf32>
      %30 = tpu.matmul %1, %29, %cst_18 {dimension_numbers = #tpu.dot_dimension_numbers<[1], [0], [0], [1], [0, 0, 1, 1], [], []>} : vector<32x32xbf16>, vector<32x128xbf16>, vector<32x128xf32> -> vector<32x128xf32>
      %c1_i32_19 = arith.constant 1 : i32
      %31 = arith.addi %12, %c1_i32_19 : i32
      %32 = vector.broadcast %31 : i32 to vector<1x128xi32>
      %33 = arith.cmpi slt, %32, %0 : vector<1x128xi32>
      %34 = vector.shape_cast %33 : vector<1x128xi1> to vector<1x128xi1>
      %35 = vector.broadcast %34 : vector<1x128xi1> to vector<32x128xi1>
      %36 = vector.broadcast %cst_3 : f32 to vector<32x128xf32>
      %37 = arith.select %35, %30, %36 : vector<32x128xi1>, vector<32x128xf32>
      %38 = arith.maximumf %25, %37 : vector<32x128xf32>
      %c2_i32 = arith.constant 2 : i32
      %39 = arith.addi %12, %c2_i32 : i32
      %40 = arith.index_cast %39 : i32 to index
      %c0_20 = arith.constant 0 : index
      %c0_21 = arith.constant 0 : index
      %41 = vector.load %arg1[%40, %c0_20, %c0_21] : memref<64x32x128xbf16, #tpu.memory_space<vmem>>, vector<1x32x128xbf16>
      %42 = vector.shape_cast %41 : vector<1x32x128xbf16> to vector<32x128xbf16>
      %cst_22 = arith.constant dense<0.000000e+00> : vector<32x128xf32>
      %43 = tpu.matmul %1, %42, %cst_22 {dimension_numbers = #tpu.dot_dimension_numbers<[1], [0], [0], [1], [0, 0, 1, 1], [], []>} : vector<32x32xbf16>, vector<32x128xbf16>, vector<32x128xf32> -> vector<32x128xf32>
      %c2_i32_23 = arith.constant 2 : i32
      %44 = arith.addi %12, %c2_i32_23 : i32
      %45 = vector.broadcast %44 : i32 to vector<1x128xi32>
      %46 = arith.cmpi slt, %45, %0 : vector<1x128xi32>
      %47 = vector.shape_cast %46 : vector<1x128xi1> to vector<1x128xi1>
      %48 = vector.broadcast %47 : vector<1x128xi1> to vector<32x128xi1>
      %49 = vector.broadcast %cst_3 : f32 to vector<32x128xf32>
      %50 = arith.select %48, %43, %49 : vector<32x128xi1>, vector<32x128xf32>
      %51 = arith.maximumf %38, %50 : vector<32x128xf32>
      %c3_i32 = arith.constant 3 : i32
      %52 = arith.addi %12, %c3_i32 : i32
      %53 = arith.index_cast %52 : i32 to index
      %c0_24 = arith.constant 0 : index
      %c0_25 = arith.constant 0 : index
      %54 = vector.load %arg1[%53, %c0_24, %c0_25] : memref<64x32x128xbf16, #tpu.memory_space<vmem>>, vector<1x32x128xbf16>
      %55 = vector.shape_cast %54 : vector<1x32x128xbf16> to vector<32x128xbf16>
      %cst_26 = arith.constant dense<0.000000e+00> : vector<32x128xf32>
      %56 = tpu.matmul %1, %55, %cst_26 {dimension_numbers = #tpu.dot_dimension_numbers<[1], [0], [0], [1], [0, 0, 1, 1], [], []>} : vector<32x32xbf16>, vector<32x128xbf16>, vector<32x128xf32> -> vector<32x128xf32>
      %c3_i32_27 = arith.constant 3 : i32
      %57 = arith.addi %12, %c3_i32_27 : i32
      %58 = vector.broadcast %57 : i32 to vector<1x128xi32>
      %59 = arith.cmpi slt, %58, %0 : vector<1x128xi32>
      %60 = vector.shape_cast %59 : vector<1x128xi1> to vector<1x128xi1>
      %61 = vector.broadcast %60 : vector<1x128xi1> to vector<32x128xi1>
      %62 = vector.broadcast %cst_3 : f32 to vector<32x128xf32>
      %63 = arith.select %61, %56, %62 : vector<32x128xi1>, vector<32x128xf32>
      %64 = arith.maximumf %51, %63 : vector<32x128xf32>
      scf.yield %64 : vector<32x128xf32>
    }
    %c16_i32_4 = arith.constant 16 : i32
    %c0_5 = arith.constant 0 : index
    %c0_6 = arith.constant 0 : index
    %5 = vector.load %arg4[%c0_5, %c0_6] : memref<32x1xf32, #tpu.memory_space<vmem>>, vector<32x1xf32>
    %6 = vector.broadcast %5 : vector<32x1xf32> to vector<32x128xf32>
    %7 = arith.addf %4, %6 : vector<32x128xf32>
    %cst_7 = arith.constant 0.000000e+00 : f32
    %8 = vector.broadcast %cst_7 : f32 to vector<32x128xf32>
    %9 = arith.maximumf %7, %8 : vector<32x128xf32>
    %c0_8 = arith.constant 0 : index
    %c0_9 = arith.constant 0 : index
    %10 = vector.load %arg5[%c0_8, %c0_9] : memref<32x128xf32, #tpu.memory_space<vmem>>, vector<32x128xf32>
    tpu.vector_store %arg5[%c0_8, %c0_9], %9 {strides = array<i32>} : memref<32x128xf32, #tpu.memory_space<vmem>>, vector<32x128xf32>,
    return
  }
  func.func @transform_0(%arg0: i32) -> (i32, i32, i32) {
    %c0_i32 = arith.constant 0 : i32
    %c0_i32_0 = arith.constant 0 : i32
    %c0_i32_1 = arith.constant 0 : i32
    return %c0_i32, %c0_i32_0, %arg0 : i32, i32, i32
  }
  func.func @transform_1(%arg0: i32) -> (i32, i32) {
    %c0_i32 = arith.constant 0 : i32
    %c0_i32_0 = arith.constant 0 : i32
    return %c0_i32, %arg0 : i32, i32
  }
  func.func @transform_2(%arg0: i32) -> (i32, i32) {
    %c0_i32 = arith.constant 0 : i32
    %c0_i32_0 = arith.constant 0 : i32
    %c0_i32_1 = arith.constant 0 : i32
    return %c0_i32, %c0_i32_0 : i32, i32
  }
  func.func @transform_3(%arg0: i32) -> (i32, i32) {
    %c0_i32 = arith.constant 0 : i32
    %c0_i32_0 = arith.constant 0 : i32
    %c0_i32_1 = arith.constant 0 : i32
    return %c0_i32, %c0_i32_0 : i32, i32
  }
  func.func @transform_4(%arg0: i32) -> (i32, i32) {
    %c0_i32 = arith.constant 0 : i32
    %c0_i32_0 = arith.constant 0 : i32
    return %c0_i32, %arg0 : i32, i32
  }
}

</mosaic_0001>

<llo_original>
// kernel: custom-call.2
$region0: #{custom-call.2}
  %s0 = inlined_call_operand.vmem [shape: f32[2,32], index: 0, kind: output, shape index: {}]

// kernel: sa_module_forward.1
$region0: #{sa_module_forward.1}
  #allocation0 [shape = 'u32[]', space=smem, size = 0x4, offset = 0x4, fixed_abs, tag = 'smem constant byte address 0x4 - core index']
  #allocation1 [shape = 'u32[144,128]{1,0:T(1,128)}', space=vmem, size = 0x12000, scoped, tag = 'internal scratch']
  %s0 = inlined_call_operand.vmem [shape: bf16[64,32,128], index: 0, kind: input, shape index: {}]
  %s1 = inlined_call_operand.vmem [shape: s32[1,128], index: 1, kind: input, shape index: {}]
  %s2 = inlined_call_operand.vmem [shape: bf16[32,32], index: 2, kind: input, shape index: {}]
  %s3 = inlined_call_operand.vmem [shape: f32[32,1], index: 3, kind: input, shape index: {}]
  %s4 = inlined_call_operand.vmem [shape: f32[32,128], index: 4, kind: output, shape index: {}]
  %s5 = sld [smem:[#allocation0]]
  $region33: #{sa_module_forward.1} parent=0
    _
  %s7 = ssub.s32 1, %s5
  %s8 = scalar_select 0, %s7, %s5
  // Predicated region
  $region2: #{sa_module_forward.1} parent=0 // pred_check
    _
  $region3: #{sa_module_forward.1} parent=0 // pred_check_branch
    %10 = sbr.rel (0) target = $region5
  $region4: #{sa_module_forward.1} parent=0 // pred_region
    _
  $region5: #{sa_module_forward.1} parent=0 // pred_fallthru
    _
  // Predicated region
  $region6: #{sa_module_forward.1} parent=0 // pred_check
    _
  $region7: #{sa_module_forward.1} parent=0 // pred_check_branch
    %12 = sbr.rel (0) target = $region9
  $region8: #{sa_module_forward.1} parent=0 // pred_region
    _
  $region9: #{sa_module_forward.1} parent=0 // pred_fallthru
    _
  // Predicated region
  $region10: #{sa_module_forward.1} parent=0 // pred_check
    _
  $region11: #{sa_module_forward.1} parent=0 // pred_check_branch
    %14 = sbr.rel (0) target = $region13
  $region12: #{sa_module_forward.1} parent=0 // pred_region
    _
  $region13: #{sa_module_forward.1} parent=0 // pred_fallthru
    _
  // Predicated region
  $region14: #{sa_module_forward.1} parent=0 // pred_check
    _
  $region15: #{sa_module_forward.1} parent=0 // pred_check_branch
    %16 = sbr.rel (0) target = $region17
  $region16: #{sa_module_forward.1} parent=0 // pred_region
    _
  $region17: #{sa_module_forward.1} parent=0 // pred_fallthru
    _
  %v18 = vld [vmem:[%s1] sm:$0x1]
  %v19 = vld [vmem:[%s2] sm:$0xf]
  %v20 = vld [vmem:[%s2 + $0x4] sm:$0xf]
  %v21 = vld [vmem:[%s2 + $0x8] sm:$0xf]
  %v22 = vld [vmem:[%s2 + $0xc] sm:$0xf]
  loop: start=0, step=1, limit=16
  $region18: #{sa_module_forward.1} parent=0 // loop_pre_header
    _
  $region19: #{sa_module_forward.1} parent=0 // loop_header
    %s24 = sphi 0, %s28
    %p25 = scmp.ge.s32.totalorder %s24, 16
    %v29 = vphi -1e+30, %v386
    %v30 = vphi -1e+30, %v387
    %v31 = vphi -1e+30, %v388
    %v32 = vphi -1e+30, %v389
  $region20: #{sa_module_forward.1} parent=0 // loop_header_branch
    %27 = sbr.rel (%p25) target = $region24
  $region21: #{sa_module_forward.1} parent=0 // loop_body
    %s33 = smul.u32 %s24, 4
    %s34 = smul.u32 %s33, 4
    %s35 = smul.addr %s34, 4
    %s36 = scalar_lea.vmem %s0, %s35
    %v37 = vld [vmem:[%s36] sm:$0xf]
    %v38 = vld [vmem:[%s36 + $0x4] sm:$0xf]
    %v39 = vld [vmem:[%s36 + $0x8] sm:$0xf]
    %v40 = vld [vmem:[%s36 + $0xc] sm:$0xf]
    %v45 = vunpack.c.l.b16 %v19
    %v46 = vunpack.c.l.b16 %v20
    %v47 = vunpack.c.l.b16 %v21
    %v48 = vunpack.c.l.b16 %v22
    %v49 = vpack.c.b16 %v46, %v45
    %v50 = vpack.c.b16 %v48, %v47
    %v55 = vunpack.c.l.b16 %v37
    %v56 = vunpack.c.l.b16 %v38
    %v57 = vunpack.c.l.b16 %v39
    %v58 = vunpack.c.l.b16 %v40
    %v59 = vpack.c.b16 %v56, %v55
    %v60 = vpack.c.b16 %v58, %v57
    %vm63 = vcmask 261120
    %v65 = vsel %vm63, %v49, 0
    %v68 = vsel %vm63, %v50, 0
    %70 = vmatprep.subr.bf16.mxu0 0
    %71 = vmatpush1.bf16.msra.mxu0 0
    %72 = vmatprep.subr.bf16.mxu0 0
    %73 = vmatpush1.bf16.msra.mxu0 0
    %74 = vmatprep.subr.bf16.mxu0 0
    %75 = vmatpush1.bf16.msra.mxu0 0
    %76 = vmatprep.subr.bf16.mxu0 0
    %77 = vmatpush1.bf16.msra.mxu0 0
    %78 = vmatprep.subr.bf16.mxu0 0
    %79 = vmatpush1.bf16.msra.mxu0 0
    %80 = vmatprep.subr.bf16.mxu0 0
    %81 = vmatpush1.bf16.msra.mxu0 0
    %82 = vmatprep.subr.bf16.mxu0 0
    %83 = vmatpush1.bf16.msra.mxu0 %v60
    %84 = vmatprep.subr.bf16.mxu0 0
    %85 = vmatpush1.bf16.msra.mxu0 %v59
    %86 = vmatprep.subr.bf16.mxu0 0
    %87 = vmatpush2.bf16.msra.mxu0 0
    %88 = vmatprep.subr.bf16.mxu0 0
    %89 = vmatpush2.bf16.msra.mxu0 0
    %90 = vmatprep.subr.bf16.mxu0 0
    %91 = vmatpush2.bf16.msra.mxu0 0
    %92 = vmatprep.subr.bf16.mxu0 0
    %93 = vmatpush2.bf16.msra.mxu0 0
    %94 = vmatprep.subr.bf16.mxu0 0
    %95 = vmatpush2.bf16.msra.mxu0 0
    %96 = vmatprep.subr.bf16.mxu0 0
    %97 = vmatpush2.bf16.msra.mxu0 0
    %98 = vmatprep.subr.bf16.mxu0 0
    %99 = vmatpush2.bf16.msra.mxu0 0
    %100 = vmatprep.subr.bf16.mxu0 0
    %101 = vmatpush2.bf16.msra.mxu0 0
    %102 = vmatprep.mubr.bf16.mxu0 0
    %103 = vmatmul.mubr.bf16.gmra.mxu0 %v65
    %v104 = vpop.f32.mrf.mxu0
    %v105 = vadd.f32 0.0, %v104
    %v106 = vpop.f32.mrf.mxu0
    %v107 = vpop.f32.mrf.mxu0
    %v108 = vadd.f32 0.0, %v107
    %v109 = vpop.f32.mrf.mxu0
    %110 = vmatprep.mubr.bf16.mxu0 0
    %111 = vmatmul.mubr.bf16.gmra.mxu0 %v68
    %v112 = vpop.f32.mrf.mxu0
    %v113 = vadd.f32 0.0, %v112
    %v114 = vpop.f32.mrf.mxu0
    %v115 = vpop.f32.mrf.mxu0
    %v116 = vadd.f32 0.0, %v115
    %v117 = vpop.f32.mrf.mxu0
    %118 = vdwg.mxu0
    %v119 = vstv %s33
    %vm120 = vcmp.lt.s32.totalorder %v119, %v18
    %v121 = vsel %vm120, 1, 0
    %v122 = vlaneseq
    %v123 = vshrl.u32 %v122, 7
    %v124 = vsub.s32 0, %v123
    %v125 = vrot.slane %v121, %v124
    %vm126 = vcmp.eq.s32.totalorder %v125, 1
    %v127 = vsel %vm126, %v105, -1e+30
    %v128 = vsel %vm126, %v108, -1e+30
    %v129 = vsel %vm126, %v113, -1e+30
    %v130 = vsel %vm126, %v116, -1e+30
    %v131 = vmax.f32 %v29, %v127
    %v132 = vmax.f32 %v30, %v128
    %v133 = vmax.f32 %v31, %v129
    %v134 = vmax.f32 %v32, %v130
    %s135 = sadd.s32 %s33, 1
    %s136 = smul.u32 %s135, 4
    %s137 = smul.addr %s136, 4
    %s138 = scalar_lea.vmem %s0, %s137
    %v139 = vld [vmem:[%s138] sm:$0xf]
    %v140 = vld [vmem:[%s138 + $0x4] sm:$0xf]
    %v141 = vld [vmem:[%s138 + $0x8] sm:$0xf]
    %v142 = vld [vmem:[%s138 + $0xc] sm:$0xf]
    %v147 = vunpack.c.l.b16 %v139
    %v148 = vunpack.c.l.b16 %v140
    %v149 = vunpack.c.l.b16 %v141
    %v150 = vunpack.c.l.b16 %v142
    %v151 = vpack.c.b16 %v148, %v147
    %v152 = vpack.c.b16 %v150, %v149
    %155 = vmatprep.subr.bf16.mxu0 0
    %156 = vmatpush1.bf16.msra.mxu0 0
    %157 = vmatprep.subr.bf16.mxu0 0
    %158 = vmatpush1.bf16.msra.mxu0 0
    %159 = vmatprep.subr.bf16.mxu0 0
    %160 = vmatpush1.bf16.msra.mxu0 0
    %161 = vmatprep.subr.bf16.mxu0 0
    %162 = vmatpush1.bf16.msra.mxu0 0
    %163 = vmatprep.subr.bf16.mxu0 0
    %164 = vmatpush1.bf16.msra.mxu0 0
    %165 = vmatprep.subr.bf16.mxu0 0
    %166 = vmatpush1.bf16.msra.mxu0 0
    %167 = vmatprep.subr.bf16.mxu0 0
    %168 = vmatpush1.bf16.msra.mxu0 %v152
    %169 = vmatprep.subr.bf16.mxu0 0
    %170 = vmatpush1.bf16.msra.mxu0 %v151
    %171 = vmatprep.subr.bf16.mxu0 0
    %172 = vmatpush2.bf16.msra.mxu0 0
    %173 = vmatprep.subr.bf16.mxu0 0
    %174 = vmatpush2.bf16.msra.mxu0 0
    %175 = vmatprep.subr.bf16.mxu0 0
    %176 = vmatpush2.bf16.msra.mxu0 0
    %177 = vmatprep.subr.bf16.mxu0 0
    %178 = vmatpush2.bf16.msra.mxu0 0
    %179 = vmatprep.subr.bf16.mxu0 0
    %180 = vmatpush2.bf16.msra.mxu0 0
    %181 = vmatprep.subr.bf16.mxu0 0
    %182 = vmatpush2.bf16.msra.mxu0 0
    %183 = vmatprep.subr.bf16.mxu0 0
    %184 = vmatpush2.bf16.msra.mxu0 0
    %185 = vmatprep.subr.bf16.mxu0 0
    %186 = vmatpush2.bf16.msra.mxu0 0
    %187 = vmatprep.mubr.bf16.mxu0 0
    %188 = vmatmul.mubr.bf16.gmra.mxu0 %v65
    %v189 = vpop.f32.mrf.mxu0
    %v190 = vadd.f32 0.0, %v189
    %v191 = vpop.f32.mrf.mxu0
    %v192 = vpop.f32.mrf.mxu0
    %v193 = vadd.f32 0.0, %v192
    %v194 = vpop.f32.mrf.mxu0
    %195 = vmatprep.mubr.bf16.mxu0 0
    %196 = vmatmul.mubr.bf16.gmra.mxu0 %v68
    %v197 = vpop.f32.mrf.mxu0
    %v198 = vadd.f32 0.0, %v197
    %v199 = vpop.f32.mrf.mxu0
    %v200 = vpop.f32.mrf.mxu0
    %v201 = vadd.f32 0.0, %v200
    %v202 = vpop.f32.mrf.mxu0
    %203 = vdwg.mxu0
    %v204 = vstv %s135
    %vm205 = vcmp.lt.s32.totalorder %v204, %v18
    %v206 = vsel %vm205, 1, 0
    %v207 = vlaneseq
    %v208 = vshrl.u32 %v207, 7
    %v209 = vsub.s32 0, %v208
    %v210 = vrot.slane %v206, %v209
    %vm211 = vcmp.eq.s32.totalorder %v210, 1
    %v212 = vsel %vm211, %v190, -1e+30
    %v213 = vsel %vm211, %v193, -1e+30
    %v214 = vsel %vm211, %v198, -1e+30
    %v215 = vsel %vm211, %v201, -1e+30
    %v216 = vmax.f32 %v131, %v212
    %v217 = vmax.f32 %v132, %v213
    %v218 = vmax.f32 %v133, %v214
    %v219 = vmax.f32 %v134, %v215
    %s220 = sadd.s32 %s33, 2
    %s221 = smul.u32 %s220, 4
    %s222 = smul.addr %s221, 4
    %s223 = scalar_lea.vmem %s0, %s222
    %v224 = vld [vmem:[%s223] sm:$0xf]
    %v225 = vld [vmem:[%s223 + $0x4] sm:$0xf]
    %v226 = vld [vmem:[%s223 + $0x8] sm:$0xf]
    %v227 = vld [vmem:[%s223 + $0xc] sm:$0xf]
    %v232 = vunpack.c.l.b16 %v224
    %v233 = vunpack.c.l.b16 %v225
    %v234 = vunpack.c.l.b16 %v226
    %v235 = vunpack.c.l.b16 %v227
    %v236 = vpack.c.b16 %v233, %v232
    %v237 = vpack.c.b16 %v235, %v234
    %240 = vmatprep.subr.bf16.mxu0 0
    %241 = vmatpush1.bf16.msra.mxu0 0
    %242 = vmatprep.subr.bf16.mxu0 0
    %243 = vmatpush1.bf16.msra.mxu0 0
    %244 = vmatprep.subr.bf16.mxu0 0
    %245 = vmatpush1.bf16.msra.mxu0 0
    %246 = vmatprep.subr.bf16.mxu0 0
    %247 = vmatpush1.bf16.msra.mxu0 0
    %248 = vmatprep.subr.bf16.mxu0 0
    %249 = vmatpush1.bf16.msra.mxu0 0
    %250 = vmatprep.subr.bf16.mxu0 0
    %251 = vmatpush1.bf16.msra.mxu0 0
    %252 = vmatprep.subr.bf16.mxu0 0
    %253 = vmatpush1.bf16.msra.mxu0 %v237
    %254 = vmatprep.subr.bf16.mxu0 0
    %255 = vmatpush1.bf16.msra.mxu0 %v236
    %256 = vmatprep.subr.bf16.mxu0 0
    %257 = vmatpush2.bf16.msra.mxu0 0
    %258 = vmatprep.subr.bf16.mxu0 0
    %259 = vmatpush2.bf16.msra.mxu0 0
    %260 = vmatprep.subr.bf16.mxu0 0
    %261 = vmatpush2.bf16.msra.mxu0 0
    %262 = vmatprep.subr.bf16.mxu0 0
    %263 = vmatpush2.bf16.msra.mxu0 0
    %264 = vmatprep.subr.bf16.mxu0 0
    %265 = vmatpush2.bf16.msra.mxu0 0
    %266 = vmatprep.subr.bf16.mxu0 0
    %267 = vmatpush2.bf16.msra.mxu0 0
    %268 = vmatprep.subr.bf16.mxu0 0
    %269 = vmatpush2.bf16.msra.mxu0 0
    %270 = vmatprep.subr.bf16.mxu0 0
    %271 = vmatpush2.bf16.msra.mxu0 0
    %272 = vmatprep.mubr.bf16.mxu0 0
    %273 = vmatmul.mubr.bf16.gmra.mxu0 %v65
    %v274 = vpop.f32.mrf.mxu0
    %v275 = vadd.f32 0.0, %v274
    %v276 = vpop.f32.mrf.mxu0
    %v277 = vpop.f32.mrf.mxu0
    %v278 = vadd.f32 0.0, %v277
    %v279 = vpop.f32.mrf.mxu0
    %280 = vmatprep.mubr.bf16.mxu0 0
    %281 = vmatmul.mubr.bf16.gmra.mxu0 %v68
    %v282 = vpop.f32.mrf.mxu0
    %v283 = vadd.f32 0.0, %v282
    %v284 = vpop.f32.mrf.mxu0
    %v285 = vpop.f32.mrf.mxu0
    %v286 = vadd.f32 0.0, %v285
    %v287 = vpop.f32.mrf.mxu0
    %288 = vdwg.mxu0
    %v289 = vstv %s220
    %vm290 = vcmp.lt.s32.totalorder %v289, %v18
    %v291 = vsel %vm290, 1, 0
    %v292 = vlaneseq
    %v293 = vshrl.u32 %v292, 7
    %v294 = vsub.s32 0, %v293
    %v295 = vrot.slane %v291, %v294
    %vm296 = vcmp.eq.s32.totalorder %v295, 1
    %v297 = vsel %vm296, %v275, -1e+30
    %v298 = vsel %vm296, %v278, -1e+30
    %v299 = vsel %vm296, %v283, -1e+30
    %v300 = vsel %vm296, %v286, -1e+30
    %v301 = vmax.f32 %v216, %v297
    %v302 = vmax.f32 %v217, %v298
    %v303 = vmax.f32 %v218, %v299
    %v304 = vmax.f32 %v219, %v300
    %s305 = sadd.s32 %s33, 3
    %s306 = smul.u32 %s305, 4
    %s307 = smul.addr %s306, 4
    %s308 = scalar_lea.vmem %s0, %s307
    %v309 = vld [vmem:[%s308] sm:$0xf]
    %v310 = vld [vmem:[%s308 + $0x4] sm:$0xf]
    %v311 = vld [vmem:[%s308 + $0x8] sm:$0xf]
    %v312 = vld [vmem:[%s308 + $0xc] sm:$0xf]
    %v317 = vunpack.c.l.b16 %v309
    %v318 = vunpack.c.l.b16 %v310
    %v319 = vunpack.c.l.b16 %v311
    %v320 = vunpack.c.l.b16 %v312
    %v321 = vpack.c.b16 %v318, %v317
    %v322 = vpack.c.b16 %v320, %v319
    %325 = vmatprep.subr.bf16.mxu0 0
    %326 = vmatpush1.bf16.msra.mxu0 0
    %327 = vmatprep.subr.bf16.mxu0 0
    %328 = vmatpush1.bf16.msra.mxu0 0
    %329 = vmatprep.subr.bf16.mxu0 0
    %330 = vmatpush1.bf16.msra.mxu0 0
    %331 = vmatprep.subr.bf16.mxu0 0
    %332 = vmatpush1.bf16.msra.mxu0 0
    %333 = vmatprep.subr.bf16.mxu0 0
    %334 = vmatpush1.bf16.msra.mxu0 0
    %335 = vmatprep.subr.bf16.mxu0 0
    %336 = vmatpush1.bf16.msra.mxu0 0
    %337 = vmatprep.subr.bf16.mxu0 0
    %338 = vmatpush1.bf16.msra.mxu0 %v322
    %339 = vmatprep.subr.bf16.mxu0 0
    %340 = vmatpush1.bf16.msra.mxu0 %v321
    %341 = vmatprep.subr.bf16.mxu0 0
    %342 = vmatpush2.bf16.msra.mxu0 0
    %343 = vmatprep.subr.bf16.mxu0 0
    %344 = vmatpush2.bf16.msra.mxu0 0
    %345 = vmatprep.subr.bf16.mxu0 0
    %346 = vmatpush2.bf16.msra.mxu0 0
    %347 = vmatprep.subr.bf16.mxu0 0
    %348 = vmatpush2.bf16.msra.mxu0 0
    %349 = vmatprep.subr.bf16.mxu0 0
    %350 = vmatpush2.bf16.msra.mxu0 0
    %351 = vmatprep.subr.bf16.mxu0 0
    %352 = vmatpush2.bf16.msra.mxu0 0
    %353 = vmatprep.subr.bf16.mxu0 0
    %354 = vmatpush2.bf16.msra.mxu0 0
    %355 = vmatprep.subr.bf16.mxu0 0
    %356 = vmatpush2.bf16.msra.mxu0 0
    %357 = vmatprep.mubr.bf16.mxu0 0
    %358 = vmatmul.mubr.bf16.gmra.mxu0 %v65
    %v359 = vpop.f32.mrf.mxu0
    %v360 = vadd.f32 0.0, %v359
    %v361 = vpop.f32.mrf.mxu0
    %v362 = vpop.f32.mrf.mxu0
    %v363 = vadd.f32 0.0, %v362
    %v364 = vpop.f32.mrf.mxu0
    %365 = vmatprep.mubr.bf16.mxu0 0
    %366 = vmatmul.mubr.bf16.gmra.mxu0 %v68
    %v367 = vpop.f32.mrf.mxu0
    %v368 = vadd.f32 0.0, %v367
    %v369 = vpop.f32.mrf.mxu0
    %v370 = vpop.f32.mrf.mxu0
    %v371 = vadd.f32 0.0, %v370
    %v372 = vpop.f32.mrf.mxu0
    %373 = vdwg.mxu0
    %v374 = vstv %s305
    %vm375 = vcmp.lt.s32.totalorder %v374, %v18
    %v376 = vsel %vm375, 1, 0
    %v377 = vlaneseq
    %v378 = vshrl.u32 %v377, 7
    %v379 = vsub.s32 0, %v378
    %v380 = vrot.slane %v376, %v379
    %vm381 = vcmp.eq.s32.totalorder %v380, 1
    %v382 = vsel %vm381, %v360, -1e+30
    %v383 = vsel %vm381, %v363, -1e+30
    %v384 = vsel %vm381, %v368, -1e+30
    %v385 = vsel %vm381, %v371, -1e+30
    %v386 = vmax.f32 %v301, %v382
    %v387 = vmax.f32 %v302, %v383
    %v388 = vmax.f32 %v303, %v384
    %v389 = vmax.f32 %v304, %v385
  $region22: #{sa_module_forward.1} parent=0 // loop_footer
    %s28 = sadd.s32 1, %s24
  $region23: #{sa_module_forward.1} parent=0 // loop_footer_branch
    %23 = sbr.rel target = $region19
  $region24: #{sa_module_forward.1} parent=0 // loop_exit
    _
  %v390 = vld [vmem:[%s3] sm:$0xff]
  %v391 = vld [vmem:[%s3 + $0x8] sm:$0xff]
  %v392 = vld [vmem:[%s3 + $0x10] sm:$0xff]
  %v393 = vld [vmem:[%s3 + $0x18] sm:$0xff]
  %395 = vset.pattern.permute.xlu0 0
  %396 = vperm.xlu0 %395, %v390
  %v397 = vpop.permute.xlu0 %396
  %400 = vset.pattern.permute.xlu0 0
  %401 = vperm.xlu0 %400, %v391
  %v402 = vpop.permute.xlu0 %401
  %405 = vset.pattern.permute.xlu0 0
  %406 = vperm.xlu0 %405, %v392
  %v407 = vpop.permute.xlu0 %406
  %410 = vset.pattern.permute.xlu0 0
  %411 = vperm.xlu0 %410, %v393
  %v412 = vpop.permute.xlu0 %411
  %v414 = vadd.f32 %v29, %v397
  %v415 = vadd.f32 %v30, %v402
  %v416 = vadd.f32 %v31, %v407
  %v417 = vadd.f32 %v32, %v412
  %v418 = vmax.f32 %v414, 0.0
  %v419 = vmax.f32 %v415, 0.0
  %v420 = vmax.f32 %v416, 0.0
  %v421 = vmax.f32 %v417, 0.0
  %422 = vst [vmem:[%s4] sm:$0xff] %v418
  %423 = vst [vmem:[%s4 + $0x8] sm:$0xff] %v419
  %424 = vst [vmem:[%s4 + $0x10] sm:$0xff] %v420
  %425 = vst [vmem:[%s4 + $0x18] sm:$0xff] %v421
  // Predicated region
  $region25: #{sa_module_forward.1} parent=0 // pred_check
    _
  $region26: #{sa_module_forward.1} parent=0 // pred_check_branch
    %427 = sbr.rel (0) target = $region28
  $region27: #{sa_module_forward.1} parent=0 // pred_region
    _
  $region28: #{sa_module_forward.1} parent=0 // pred_fallthru
    _
  // Predicated region
  $region29: #{sa_module_forward.1} parent=0 // pred_check
    _
  $region30: #{sa_module_forward.1} parent=0 // pred_check_branch
    %429 = sbr.rel (0) target = $region32
  $region31: #{sa_module_forward.1} parent=0 // pred_region
    _
  $region32: #{sa_module_forward.1} parent=0 // pred_fallthru
    _

</llo_original>
